<compile_context>
chip_gen: v5e
topology: v5e:2x2
jax: 0.10.0
libtpu: 0.0.40
codegen_flags: <defaults>
</compile_context>

<pallas_src>
import jax
import jax.numpy as jnp
from jax.experimental import pallas as pl
from jax.experimental.pallas import tpu as pltpu


def binary_classification_kernel(x1_ref, x2_ref, w_emb_ref, b_emb_ref,
                                 w_out_ref, b_out_ref, o_ref):
    bm = x1_ref.shape[0]

    # Fused Siamese embedding: stack both faces so the shared weight matrix is
    # streamed through the MXU a single time for this tile.
    x = jnp.concatenate([x1_ref[...], x2_ref[...]], axis=0)          # (2*bm, D) bf16
    e = jnp.dot(x, w_emb_ref[...], preferred_element_type=jnp.float32)
    e = jnp.maximum(e + b_emb_ref[...], 0.0)                          # f32, (2*bm, Np)

    # |siamese(face1) - siamese(face2)|
    d = jnp.abs(e[:bm, :] - e[bm:, :])                                # (bm, Np) f32

    # fc_out as a VPU lane reduction (N=1 GEMV would waste an MXU pass).
    logits = jnp.sum(d * w_out_ref[...], axis=-1, keepdims=True) + b_out_ref[0, 0]
    o_ref[...] = jax.nn.sigmoid(logits).astype(o_ref.dtype)


def binary_classification(face1, face2, w_emb, b_emb, w_out, b_out, *, bm=128):
    """face1, face2: (B, C, H, W) float32.  Returns (B, 1) sigmoid probabilities."""
    B = face1.shape[0]
    D, N = w_emb.shape
    Np = ((N + 127) // 128) * 128          # lane-dense padded out_size (200 -> 256)

    # bf16 activations / embedding weights (f32 accumulation in the kernel).
    x1 = face1.reshape(B, -1).astype(jnp.bfloat16)
    x2 = face2.reshape(B, -1).astype(jnp.bfloat16)
    w_emb_p = jnp.pad(w_emb.astype(jnp.bfloat16), ((0, 0), (0, Np - N)))
    b_emb_p = jnp.pad(b_emb.reshape(1, N).astype(jnp.float32), ((0, 0), (0, Np - N)))
    w_out_p = jnp.pad(w_out.reshape(1, N).astype(jnp.float32), ((0, 0), (0, Np - N)))
    b_out_s = b_out.reshape(1, 1).astype(jnp.float32)

    bm = min(bm, B)
    grid = (pl.cdiv(B, bm),)

    cost = pl.CostEstimate(
        flops=2 * (2 * B) * D * Np + 8 * B * Np,
        transcendentals=2 * B,
        bytes_accessed=int(x1.nbytes + x2.nbytes + w_emb_p.nbytes
                           + b_emb_p.nbytes + w_out_p.nbytes + 4 + B * 4),
    )

    return pl.pallas_call(
        binary_classification_kernel,
        out_shape=jax.ShapeDtypeStruct((B, 1), jnp.float32),
        grid=grid,
        in_specs=[
            pl.BlockSpec((bm, D), lambda i: (i, 0)),                  # x1 tile
            pl.BlockSpec((bm, D), lambda i: (i, 0)),                  # x2 tile
            pl.BlockSpec((D, Np), lambda i: (0, 0)),                  # w_emb (resident)
            pl.BlockSpec((1, Np), lambda i: (0, 0)),                  # b_emb (resident)
            pl.BlockSpec((1, Np), lambda i: (0, 0)),                  # w_out row (resident)
            pl.BlockSpec(memory_space=pltpu.MemorySpace.SMEM),        # b_out scalar
        ],
        out_specs=pl.BlockSpec((bm, 1), lambda i: (i, 0)),
        compiler_params=pltpu.CompilerParams(
            dimension_semantics=("parallel",)),
        cost_estimate=cost,
    )(x1, x2, w_emb_p, b_emb_p, w_out_p, b_out_s)


def reference(face1, face2, w_emb, b_emb, w_out, b_out):
    """Pure-JAX reference with the same bf16 input/weight rounding as the kernel."""
    B = face1.shape[0]
    x1 = face1.reshape(B, -1).astype(jnp.bfloat16).astype(jnp.float32)
    x2 = face2.reshape(B, -1).astype(jnp.bfloat16).astype(jnp.float32)
    w = w_emb.astype(jnp.bfloat16).astype(jnp.float32)
    e1 = jnp.maximum(x1 @ w + b_emb.reshape(1, -1), 0.0)
    e2 = jnp.maximum(x2 @ w + b_emb.reshape(1, -1), 0.0)
    d = jnp.abs(e1 - e2)
    return jax.nn.sigmoid(d @ w_out.reshape(-1, 1) + b_out.reshape(1, 1))


if __name__ == "__main__":
    # small, deterministic setup
    B, C, H, W = 2, 3, 16, 16
    out_size = 200
    in_features = C * H * W

    key = jax.random.PRNGKey(0)
    k1, k2, k3, k4, k5, k6 = jax.random.split(key, 6)

    face1 = jax.random.normal(k1, (B, C, H, W), dtype=jnp.float32)
    face2 = jax.random.normal(k2, (B, C, H, W), dtype=jnp.float32)

    # deterministic parameter init (uniform, PyTorch-Linear-like scaling)
    bound_emb = 1.0 / jnp.sqrt(in_features)
    w_emb = jax.random.uniform(k3, (in_features, out_size), jnp.float32,
                               -bound_emb, bound_emb)
    b_emb = jax.random.uniform(k4, (1, out_size), jnp.float32,
                               -bound_emb, bound_emb)
    bound_out = 1.0 / jnp.sqrt(out_size)
    w_out = jax.random.uniform(k5, (out_size, 1), jnp.float32,
                               -bound_out, bound_out)
    b_out = jax.random.uniform(k6, (1, 1), jnp.float32,
                               -bound_out, bound_out)

    out = binary_classification(face1, face2, w_emb, b_emb, w_out, b_out)
    out = jax.block_until_ready(out)

    ref = reference(face1, face2, w_emb, b_emb, w_out, b_out)
    assert out.shape == (B, 1), out.shape
    assert jnp.allclose(out, ref, atol=1e-4, rtol=1e-4), (out, ref)

    print("KERNEL_OK")
</pallas_src>

<mosaic_0001>
module attributes {stable_mosaic.version = 11 : i64} {
  func.func @binary_classification_kernel(%arg0: i32, %arg1: memref<2x768xbf16, #tpu.memory_space<vmem>>, %arg2: memref<2x768xbf16, #tpu.memory_space<vmem>>, %arg3: memref<768x256xbf16, #tpu.memory_space<vmem>>, %arg4: memref<1x256xf32, #tpu.memory_space<vmem>>, %arg5: memref<1x256xf32, #tpu.memory_space<vmem>>, %arg6: memref<1x1xf32, #tpu.memory_space<smem>>, %arg7: memref<2x1xf32, #tpu.memory_space<vmem>>) attributes {dimension_semantics = [#tpu.dimension_semantics<parallel>], iteration_bounds = array<i64: 1>, scalar_prefetch = 0 : i64, scratch_operands = 0 : i64, tpu.core_type = #tpu.core_type<tc>, window_params = [{transform_indices = @transform_0, window_bounds = array<i64: 2, 768>}, {transform_indices = @transform_1, window_bounds = array<i64: 2, 768>}, {pipeline_mode = #tpu.pipeline_mode<synchronous>, transform_indices = @transform_2, window_bounds = array<i64: 768, 256>}, {pipeline_mode = #tpu.pipeline_mode<synchronous>, transform_indices = @transform_3, window_bounds = array<i64: 1, 256>}, {pipeline_mode = #tpu.pipeline_mode<synchronous>, transform_indices = @transform_4, window_bounds = array<i64: 1, 256>}, {transform_indices = @transform_5, window_bounds = array<i64: 1, 1>}, {transform_indices = @transform_6, window_bounds = array<i64: 2, 1>}]} {
    %c0 = arith.constant 0 : index
    %c0_0 = arith.constant 0 : index
    %0 = vector.load %arg1[%c0, %c0_0] : memref<2x768xbf16, #tpu.memory_space<vmem>>, vector<2x768xbf16>
    %c0_1 = arith.constant 0 : index
    %c0_2 = arith.constant 0 : index
    %1 = vector.load %arg2[%c0_1, %c0_2] : memref<2x768xbf16, #tpu.memory_space<vmem>>, vector<2x768xbf16>
    %2 = tpu.concatenate %0, %1 in 0 : vector<2x768xbf16>, vector<2x768xbf16> -> vector<4x768xbf16>
    %c0_3 = arith.constant 0 : index
    %c0_4 = arith.constant 0 : index
    %3 = vector.load %arg3[%c0_3, %c0_4] : memref<768x256xbf16, #tpu.memory_space<vmem>>, vector<768x256xbf16>
    %cst = arith.constant dense<0.000000e+00> : vector<4x256xf32>
    %4 = tpu.matmul %2, %3, %cst {dimension_numbers = #tpu.dot_dimension_numbers<[1], [0], [0], [1], [0, 0, 1, 1], [], []>} : vector<4x768xbf16>, vector<768x256xbf16>, vector<4x256xf32> -> vector<4x256xf32>
    %c0_5 = arith.constant 0 : index
    %c0_6 = arith.constant 0 : index
    %5 = vector.load %arg4[%c0_5, %c0_6] : memref<1x256xf32, #tpu.memory_space<vmem>>, vector<1x256xf32>
    %6 = vector.broadcast %5 : vector<1x256xf32> to vector<4x256xf32>
    %7 = arith.addf %4, %6 : vector<4x256xf32>
    %cst_7 = arith.constant 0.000000e+00 : f32
    %8 = vector.broadcast %cst_7 : f32 to vector<4x256xf32>
    %9 = arith.maximumf %7, %8 : vector<4x256xf32>
    %10 = vector.extract_strided_slice %9 {offsets = [0, 0], sizes = [2, 256], strides = [1, 1]} : vector<4x256xf32> to vector<2x256xf32>
    %11 = vector.extract_strided_slice %9 {offsets = [2, 0], sizes = [2, 256], strides = [1, 1]} : vector<4x256xf32> to vector<2x256xf32>
    %12 = arith.subf %10, %11 : vector<2x256xf32>
    %13 = math.absf %12 : vector<2x256xf32>
    %c0_8 = arith.constant 0 : index
    %c0_9 = arith.constant 0 : index
    %14 = vector.load %arg5[%c0_8, %c0_9] : memref<1x256xf32, #tpu.memory_space<vmem>>, vector<1x256xf32>
    %15 = vector.broadcast %14 : vector<1x256xf32> to vector<2x256xf32>
    %16 = arith.mulf %13, %15 : vector<2x256xf32>
    %cst_10 = arith.constant dense<0.000000e+00> : vector<2xf32>
    %17 = vector.multi_reduction <add>, %16, %cst_10 [1] : vector<2x256xf32> to vector<2xf32>
    %18 = vector.shape_cast %17 : vector<2xf32> to vector<2x1xf32>
    %c0_11 = arith.constant 0 : index
    %c0_12 = arith.constant 0 : index
    %19 = memref.load %arg6[%c0_11, %c0_12] : memref<1x1xf32, #tpu.memory_space<smem>>
    %20 = vector.broadcast %19 : f32 to vector<2x1xf32>
    %21 = arith.addf %18, %20 : vector<2x1xf32>
    %22 = arith.negf %21 : vector<2x1xf32>
    %23 = math.exp %22 : vector<2x1xf32>
    %cst_13 = arith.constant 1.000000e+00 : f32
    %24 = vector.broadcast %cst_13 : f32 to vector<2x1xf32>
    %25 = arith.addf %24, %23 : vector<2x1xf32>
    %26 = arith.divf %24, %25 : vector<2x1xf32>
    %c0_14 = arith.constant 0 : index
    %c0_15 = arith.constant 0 : index
    %27 = vector.load %arg7[%c0_14, %c0_15] : memref<2x1xf32, #tpu.memory_space<vmem>>, vector<2x1xf32>
    tpu.vector_store %arg7[%c0_14, %c0_15], %26 {strides = array<i32>} : memref<2x1xf32, #tpu.memory_space<vmem>>, vector<2x1xf32>,
    return
  }
  func.func @transform_0(%arg0: i32) -> (i32, i32) {
    %c0_i32 = arith.constant 0 : i32
    %c0_i32_0 = arith.constant 0 : i32
    return %arg0, %c0_i32 : i32, i32
  }
  func.func @transform_1(%arg0: i32) -> (i32, i32) {
    %c0_i32 = arith.constant 0 : i32
    %c0_i32_0 = arith.constant 0 : i32
    return %arg0, %c0_i32 : i32, i32
  }
  func.func @transform_2(%arg0: i32) -> (i32, i32) {
    %c0_i32 = arith.constant 0 : i32
    %c0_i32_0 = arith.constant 0 : i32
    %c0_i32_1 = arith.constant 0 : i32
    return %c0_i32, %c0_i32_0 : i32, i32
  }
  func.func @transform_3(%arg0: i32) -> (i32, i32) {
    %c0_i32 = arith.constant 0 : i32
    %c0_i32_0 = arith.constant 0 : i32
    %c0_i32_1 = arith.constant 0 : i32
    return %c0_i32, %c0_i32_0 : i32, i32
  }
  func.func @transform_4(%arg0: i32) -> (i32, i32) {
    %c0_i32 = arith.constant 0 : i32
    %c0_i32_0 = arith.constant 0 : i32
    %c0_i32_1 = arith.constant 0 : i32
    return %c0_i32, %c0_i32_0 : i32, i32
  }
  func.func @transform_5(%arg0: i32) -> (i32, i32) {
    %c0_i32 = arith.constant 0 : i32
    %c0_i32_0 = arith.constant 0 : i32
    %c0_i32_1 = arith.constant 0 : i32
    return %c0_i32, %c0_i32_0 : i32, i32
  }
  func.func @transform_6(%arg0: i32) -> (i32, i32) {
    %c0_i32 = arith.constant 0 : i32
    %c0_i32_0 = arith.constant 0 : i32
    return %arg0, %c0_i32 : i32, i32
  }
}

</mosaic_0001>

<llo_original>
// kernel: tpu_custom_call.1
$region0: #{tpu_custom_call.1}
  #allocation0 [shape = 'u32[]', space=smem, size = 0x4, offset = 0x4, fixed_abs, tag = 'smem constant byte address 0x4 - core index']
  #allocation1 [shape = 'u32[72,128]{1,0:T(1,128)}', space=vmem, size = 0x9000, scoped, tag = 'internal scratch']
  #allocation2 [shape = 'f32[1,1]{1,0:T(1,128)S(6)}', space=smem, size = 0x200, scoped, tag = 'scoped memory for tpu_custom_call.1']
  %s0 = inlined_call_operand.hbm [shape: bf16[2,768], index: 0, kind: input, shape index: {}]
  %s1 = inlined_call_operand.hbm [shape: bf16[2,768], index: 1, kind: input, shape index: {}]
  %s2 = inlined_call_operand.hbm [shape: bf16[768,256], index: 2, kind: input, shape index: {}]
  %s3 = inlined_call_operand.vmem [shape: f32[1,256], index: 3, kind: input, shape index: {}]
  %s4 = inlined_call_operand.vmem [shape: f32[1,256], index: 4, kind: input, shape index: {}]
  %s5 = inlined_call_operand.<no memory space> [shape: f32[1,1], index: 5, kind: input, shape index: {}]
  %s6 = inlined_call_operand.vmem [shape: f32[2,1], index: 6, kind: output, shape index: {}]
  %s7 = sld [smem:[#allocation0]]
  $region46: #{tpu_custom_call.1} parent=0
    _
  %s9 = ssub.s32 1, %s7
  %s10 = scalar_select 0, %s9, %s7
  %11 = sst [smem:[#allocation2]] %s5
  $region1: #{tpu_custom_call.1} parent=0
    #allocation3 [shape = 'u8[3072]{0}', space=vmem, size = 0xc00, scoped, tag = 'input window, operand 0, single buffered']
    #allocation4 [shape = 's32[1]{0}', space=sflag, size = 0x4, scoped, tag = 'scoped memory for tpu_custom_call.1']
    #allocation5 [shape = 'u8[3072]{0}', space=vmem, size = 0xc00, scoped, tag = 'input window, operand 1, single buffered']
    #allocation6 [shape = 's32[1]{0}', space=sflag, size = 0x4, scoped, tag = 'scoped memory for tpu_custom_call.1']
    #allocation7 [shape = 'u8[393216]{0}', space=vmem, size = 0x60000, scoped, tag = 'input window, operand 2, single buffered']
    %12 = vsyncpa [#allocation4], 0
    %13 = vsyncpa [#allocation6], 0
    // Predicated region
    $region2: #{tpu_custom_call.1} parent=1 // pred_check
      _
    $region3: #{tpu_custom_call.1} parent=1 // pred_check_branch
      %15 = sbr.rel (0) target = $region5
    $region4: #{tpu_custom_call.1} parent=1 // pred_region
      %17 = vsyncadd [#allocation4], 0
      %s19 = sshll.u32 %s0, 4
      %s20 = int_to_ptr.hbm [resolvable:$true] %s19
      %s21 = sshll.u32 [#allocation3], 4
      %s22 = int_to_ptr.vmem [resolvable:$true] %s21
      %24 = dma.hbm_to_vmem [thread:$0]  %s20, 96, %s22, [#allocation4]
    $region5: #{tpu_custom_call.1} parent=1 // pred_fallthru
      _
    // Predicated region
    $region6: #{tpu_custom_call.1} parent=1 // pred_check
      _
    $region7: #{tpu_custom_call.1} parent=1 // pred_check_branch
      %26 = sbr.rel (0) target = $region9
    $region8: #{tpu_custom_call.1} parent=1 // pred_region
      %28 = vsyncadd [#allocation6], 0
      %s30 = sshll.u32 %s1, 4
      %s31 = int_to_ptr.hbm [resolvable:$true] %s30
      %s32 = sshll.u32 [#allocation5], 4
      %s33 = int_to_ptr.vmem [resolvable:$true] %s32
      %35 = dma.hbm_to_vmem [thread:$0]  %s31, 96, %s33, [#allocation6]
    $region9: #{tpu_custom_call.1} parent=1 // pred_fallthru
      _
    // Predicated region
    $region10: #{tpu_custom_call.1} parent=1 // pred_check
      _
    $region11: #{tpu_custom_call.1} parent=1 // pred_check_branch
      %37 = sbr.rel (0) target = $region13
    $region12: #{tpu_custom_call.1} parent=1 // pred_region
      %39 = vsyncadd [#allocation6], 0
      %s40 = sshll.u32 %s2, 4
      %s41 = int_to_ptr.hbm [resolvable:$true] %s40
      %s42 = sshll.u32 [#allocation7], 4
      %s43 = int_to_ptr.vmem [resolvable:$true] %s42
      %48 = dma.hbm_to_vmem [thread:$0]  %s41, 12288, %s43, [#allocation6], 128, 128, 8
    $region13: #{tpu_custom_call.1} parent=1 // pred_fallthru
      _
    // Predicated region
    $region14: #{tpu_custom_call.1} parent=1 // pred_check
      _
    $region15: #{tpu_custom_call.1} parent=1 // pred_check_branch
      %50 = sbr.rel (0) target = $region17
    $region16: #{tpu_custom_call.1} parent=1 // pred_region
      _
    $region17: #{tpu_custom_call.1} parent=1 // pred_fallthru
      _
    // Predicated region
    $region18: #{tpu_custom_call.1} parent=1 // pred_check
      _
    $region19: #{tpu_custom_call.1} parent=1 // pred_check_branch
      %52 = sbr.rel (0) target = $region21
    $region20: #{tpu_custom_call.1} parent=1 // pred_region
      _
    $region21: #{tpu_custom_call.1} parent=1 // pred_fallthru
      _
    // Predicated region
    $region22: #{tpu_custom_call.1} parent=1 // pred_check
      _
    $region23: #{tpu_custom_call.1} parent=1 // pred_check_branch
      %54 = sbr.rel (0) target = $region25
    $region24: #{tpu_custom_call.1} parent=1 // pred_region
      _
    $region25: #{tpu_custom_call.1} parent=1 // pred_fallthru
      _
    // Predicated region
    $region26: #{tpu_custom_call.1} parent=1 // pred_check
      _
    $region27: #{tpu_custom_call.1} parent=1 // pred_check_branch
      %56 = sbr.rel (0) target = $region29
    $region28: #{tpu_custom_call.1} parent=1 // pred_region
      %58 = dma.done [#allocation4], 96
    $region29: #{tpu_custom_call.1} parent=1 // pred_fallthru
      _
    // Predicated region
    $region30: #{tpu_custom_call.1} parent=1 // pred_check
      _
    $region31: #{tpu_custom_call.1} parent=1 // pred_check_branch
      %60 = sbr.rel (0) target = $region33
    $region32: #{tpu_custom_call.1} parent=1 // pred_region
      %62 = dma.done [#allocation6], 96
    $region33: #{tpu_custom_call.1} parent=1 // pred_fallthru
      _
    // Predicated region
    $region34: #{tpu_custom_call.1} parent=1 // pred_check
      _
    $region35: #{tpu_custom_call.1} parent=1 // pred_check_branch
      %64 = sbr.rel (0) target = $region37
    $region36: #{tpu_custom_call.1} parent=1 // pred_region
      %66 = dma.done [#allocation6], 12288
    $region37: #{tpu_custom_call.1} parent=1 // pred_fallthru
      _
    %v67 = vld [vmem:[#allocation3] sm:$0x3f]
    %v68 = vld [vmem:[#allocation5] sm:$0x3f]
    %70 = vst [vmem:[#allocation1] ss:$9 sm:$0xff] %v67
    %v71 = vld [vmem:[#allocation1] sm:$0xff]
    %v72 = vld [vmem:[#allocation1 + $0x9] sm:$0xff]
    %v73 = vld [vmem:[#allocation1 + $0x12] sm:$0xff]
    %v74 = vld [vmem:[#allocation1 + $0x1b] sm:$0xff]
    %v75 = vld [vmem:[#allocation1 + $0x24] sm:$0xff]
    %v76 = vld [vmem:[#allocation1 + $0x2d] sm:$0xff]
    %s78 = scalar_lea.vmem [#allocation1], 1
    %79 = vst [vmem:[%s78] ss:$9 sm:$0xff] %v68
    %v80 = vld [vmem:[#allocation1] sm:$0xff]
    %v81 = vld [vmem:[#allocation1 + $0x9] sm:$0xff]
    %v82 = vld [vmem:[#allocation1 + $0x12] sm:$0xff]
    %v83 = vld [vmem:[#allocation1 + $0x1b] sm:$0xff]
    %v84 = vld [vmem:[#allocation1 + $0x24] sm:$0xff]
    %v85 = vld [vmem:[#allocation1 + $0x2d] sm:$0xff]
    %vm86 = vcmask 1040384
    %v87 = vsel %vm86, %v71, %v80
    %v89 = vsel %vm86, %v72, %v81
    %v91 = vsel %vm86, %v73, %v82
    %v93 = vsel %vm86, %v74, %v83
    %v95 = vsel %vm86, %v75, %v84
    %v97 = vsel %vm86, %v76, %v85
    %v99 = vld [vmem:[#allocation7] sm:$0xff]
    %v100 = vld [vmem:[#allocation7 + $0x8] sm:$0xff]
    %v101 = vld [vmem:[#allocation7 + $0x10] sm:$0xff]
    %v102 = vld [vmem:[#allocation7 + $0x18] sm:$0xff]
    %v103 = vld [vmem:[#allocation7 + $0x20] sm:$0xff]
    %v104 = vld [vmem:[#allocation7 + $0x28] sm:$0xff]
    %v105 = vld [vmem:[#allocation7 + $0x30] sm:$0xff]
    %v106 = vld [vmem:[#allocation7 + $0x38] sm:$0xff]
    %v107 = vld [vmem:[#allocation7 + $0x40] sm:$0xff]
    %v108 = vld [vmem:[#allocation7 + $0x48] sm:$0xff]
    %v109 = vld [vmem:[#allocation7 + $0x50] sm:$0xff]
    %v110 = vld [vmem:[#allocation7 + $0x58] sm:$0xff]
    %v111 = vld [vmem:[#allocation7 + $0x60] sm:$0xff]
    %v112 = vld [vmem:[#allocation7 + $0x68] sm:$0xff]
    %v113 = vld [vmem:[#allocation7 + $0x70] sm:$0xff]
    %v114 = vld [vmem:[#allocation7 + $0x78] sm:$0xff]
    %v115 = vld [vmem:[#allocation7 + $0x80] sm:$0xff]
    %v116 = vld [vmem:[#allocation7 + $0x88] sm:$0xff]
    %v117 = vld [vmem:[#allocation7 + $0x90] sm:$0xff]
    %v118 = vld [vmem:[#allocation7 + $0x98] sm:$0xff]
    %v119 = vld [vmem:[#allocation7 + $0xa0] sm:$0xff]
    %v120 = vld [vmem:[#allocation7 + $0xa8] sm:$0xff]
    %v121 = vld [vmem:[#allocation7 + $0xb0] sm:$0xff]
    %v122 = vld [vmem:[#allocation7 + $0xb8] sm:$0xff]
    %v123 = vld [vmem:[#allocation7 + $0xc0] sm:$0xff]
    %v124 = vld [vmem:[#allocation7 + $0xc8] sm:$0xff]
    %v125 = vld [vmem:[#allocation7 + $0xd0] sm:$0xff]
    %v126 = vld [vmem:[#allocation7 + $0xd8] sm:$0xff]
    %v127 = vld [vmem:[#allocation7 + $0xe0] sm:$0xff]
    %v128 = vld [vmem:[#allocation7 + $0xe8] sm:$0xff]
    %v129 = vld [vmem:[#allocation7 + $0xf0] sm:$0xff]
    %v130 = vld [vmem:[#allocation7 + $0xf8] sm:$0xff]
    %v131 = vld [vmem:[#allocation7 + $0x100] sm:$0xff]
    %v132 = vld [vmem:[#allocation7 + $0x108] sm:$0xff]
    %v133 = vld [vmem:[#allocation7 + $0x110] sm:$0xff]
    %v134 = vld [vmem:[#allocation7 + $0x118] sm:$0xff]
    %v135 = vld [vmem:[#allocation7 + $0x120] sm:$0xff]
    %v136 = vld [vmem:[#allocation7 + $0x128] sm:$0xff]
    %v137 = vld [vmem:[#allocation7 + $0x130] sm:$0xff]
    %v138 = vld [vmem:[#allocation7 + $0x138] sm:$0xff]
    %v139 = vld [vmem:[#allocation7 + $0x140] sm:$0xff]
    %v140 = vld [vmem:[#allocation7 + $0x148] sm:$0xff]
    %v141 = vld [vmem:[#allocation7 + $0x150] sm:$0xff]
    %v142 = vld [vmem:[#allocation7 + $0x158] sm:$0xff]
    %v143 = vld [vmem:[#allocation7 + $0x160] sm:$0xff]
    %v144 = vld [vmem:[#allocation7 + $0x168] sm:$0xff]
    %v145 = vld [vmem:[#allocation7 + $0x170] sm:$0xff]
    %v146 = vld [vmem:[#allocation7 + $0x178] sm:$0xff]
    %v147 = vld [vmem:[#allocation7 + $0x180] sm:$0xff]
    %v148 = vld [vmem:[#allocation7 + $0x188] sm:$0xff]
    %v149 = vld [vmem:[#allocation7 + $0x190] sm:$0xff]
    %v150 = vld [vmem:[#allocation7 + $0x198] sm:$0xff]
    %v151 = vld [vmem:[#allocation7 + $0x1a0] sm:$0xff]
    %v152 = vld [vmem:[#allocation7 + $0x1a8] sm:$0xff]
    %v153 = vld [vmem:[#allocation7 + $0x1b0] sm:$0xff]
    %v154 = vld [vmem:[#allocation7 + $0x1b8] sm:$0xff]
    %v155 = vld [vmem:[#allocation7 + $0x1c0] sm:$0xff]
    %v156 = vld [vmem:[#allocation7 + $0x1c8] sm:$0xff]
    %v157 = vld [vmem:[#allocation7 + $0x1d0] sm:$0xff]
    %v158 = vld [vmem:[#allocation7 + $0x1d8] sm:$0xff]
    %v159 = vld [vmem:[#allocation7 + $0x1e0] sm:$0xff]
    %v160 = vld [vmem:[#allocation7 + $0x1e8] sm:$0xff]
    %v161 = vld [vmem:[#allocation7 + $0x1f0] sm:$0xff]
    %v162 = vld [vmem:[#allocation7 + $0x1f8] sm:$0xff]
    %v163 = vld [vmem:[#allocation7 + $0x200] sm:$0xff]
    %v164 = vld [vmem:[#allocation7 + $0x208] sm:$0xff]
    %v165 = vld [vmem:[#allocation7 + $0x210] sm:$0xff]
    %v166 = vld [vmem:[#allocation7 + $0x218] sm:$0xff]
    %v167 = vld [vmem:[#allocation7 + $0x220] sm:$0xff]
    %v168 = vld [vmem:[#allocation7 + $0x228] sm:$0xff]
    %v169 = vld [vmem:[#allocation7 + $0x230] sm:$0xff]
    %v170 = vld [vmem:[#allocation7 + $0x238] sm:$0xff]
    %v171 = vld [vmem:[#allocation7 + $0x240] sm:$0xff]
    %v172 = vld [vmem:[#allocation7 + $0x248] sm:$0xff]
    %v173 = vld [vmem:[#allocation7 + $0x250] sm:$0xff]
    %v174 = vld [vmem:[#allocation7 + $0x258] sm:$0xff]
    %v175 = vld [vmem:[#allocation7 + $0x260] sm:$0xff]
    %v176 = vld [vmem:[#allocation7 + $0x268] sm:$0xff]
    %v177 = vld [vmem:[#allocation7 + $0x270] sm:$0xff]
    %v178 = vld [vmem:[#allocation7 + $0x278] sm:$0xff]
    %v179 = vld [vmem:[#allocation7 + $0x280] sm:$0xff]
    %v180 = vld [vmem:[#allocation7 + $0x288] sm:$0xff]
    %v181 = vld [vmem:[#allocation7 + $0x290] sm:$0xff]
    %v182 = vld [vmem:[#allocation7 + $0x298] sm:$0xff]
    %v183 = vld [vmem:[#allocation7 + $0x2a0] sm:$0xff]
    %v184 = vld [vmem:[#allocation7 + $0x2a8] sm:$0xff]
    %v185 = vld [vmem:[#allocation7 + $0x2b0] sm:$0xff]
    %v186 = vld [vmem:[#allocation7 + $0x2b8] sm:$0xff]
    %v187 = vld [vmem:[#allocation7 + $0x2c0] sm:$0xff]
    %v188 = vld [vmem:[#allocation7 + $0x2c8] sm:$0xff]
    %v189 = vld [vmem:[#allocation7 + $0x2d0] sm:$0xff]
    %v190 = vld [vmem:[#allocation7 + $0x2d8] sm:$0xff]
    %v191 = vld [vmem:[#allocation7 + $0x2e0] sm:$0xff]
    %v192 = vld [vmem:[#allocation7 + $0x2e8] sm:$0xff]
    %v193 = vld [vmem:[#allocation7 + $0x2f0] sm:$0xff]
    %v194 = vld [vmem:[#allocation7 + $0x2f8] sm:$0xff]
    %v195 = vld [vmem:[%s3] sm:$0x3]
    %v197 = vperm.slane %v195, 0
    %v198 = vperm.slane %v195, 1
    %v297 = vunpack.c.l.b16 %v99
    %v298 = vunpack.c.h.b16 %v99
    %v299 = vunpack.c.l.b16 %v100
    %v300 = vunpack.c.h.b16 %v100
    %v301 = vunpack.c.l.b16 %v101
    %v302 = vunpack.c.h.b16 %v101
    %v303 = vunpack.c.l.b16 %v102
    %v304 = vunpack.c.h.b16 %v102
    %v305 = vunpack.c.l.b16 %v103
    %v306 = vunpack.c.h.b16 %v103
    %v307 = vunpack.c.l.b16 %v104
    %v308 = vunpack.c.h.b16 %v104
    %v309 = vunpack.c.l.b16 %v105
    %v310 = vunpack.c.h.b16 %v105
    %v311 = vunpack.c.l.b16 %v106
    %v312 = vunpack.c.h.b16 %v106
    %v313 = vunpack.c.l.b16 %v107
    %v314 = vunpack.c.h.b16 %v107
    %v315 = vunpack.c.l.b16 %v108
    %v316 = vunpack.c.h.b16 %v108
    %v317 = vunpack.c.l.b16 %v109
    %v318 = vunpack.c.h.b16 %v109
    %v319 = vunpack.c.l.b16 %v110
    %v320 = vunpack.c.h.b16 %v110
    %v321 = vunpack.c.l.b16 %v111
    %v322 = vunpack.c.h.b16 %v111
    %v323 = vunpack.c.l.b16 %v112
    %v324 = vunpack.c.h.b16 %v112
    %v325 = vunpack.c.l.b16 %v113
    %v326 = vunpack.c.h.b16 %v113
    %v327 = vunpack.c.l.b16 %v114
    %v328 = vunpack.c.h.b16 %v114
    %v329 = vunpack.c.l.b16 %v115
    %v330 = vunpack.c.h.b16 %v115
    %v331 = vunpack.c.l.b16 %v116
    %v332 = vunpack.c.h.b16 %v116
    %v333 = vunpack.c.l.b16 %v117
    %v334 = vunpack.c.h.b16 %v117
    %v335 = vunpack.c.l.b16 %v118
    %v336 = vunpack.c.h.b16 %v118
    %v337 = vunpack.c.l.b16 %v119
    %v338 = vunpack.c.h.b16 %v119
    %v339 = vunpack.c.l.b16 %v120
    %v340 = vunpack.c.h.b16 %v120
    %v341 = vunpack.c.l.b16 %v121
    %v342 = vunpack.c.h.b16 %v121
    %v343 = vunpack.c.l.b16 %v122
    %v344 = vunpack.c.h.b16 %v122
    %v345 = vunpack.c.l.b16 %v123
    %v346 = vunpack.c.h.b16 %v123
    %v347 = vunpack.c.l.b16 %v124
    %v348 = vunpack.c.h.b16 %v124
    %v349 = vunpack.c.l.b16 %v125
    %v350 = vunpack.c.h.b16 %v125
    %v351 = vunpack.c.l.b16 %v126
    %v352 = vunpack.c.h.b16 %v126
    %v353 = vunpack.c.l.b16 %v127
    %v354 = vunpack.c.h.b16 %v127
    %v355 = vunpack.c.l.b16 %v128
    %v356 = vunpack.c.h.b16 %v128
    %v357 = vunpack.c.l.b16 %v129
    %v358 = vunpack.c.h.b16 %v129
    %v359 = vunpack.c.l.b16 %v130
    %v360 = vunpack.c.h.b16 %v130
    %v361 = vunpack.c.l.b16 %v131
    %v362 = vunpack.c.h.b16 %v131
    %v363 = vunpack.c.l.b16 %v132
    %v364 = vunpack.c.h.b16 %v132
    %v365 = vunpack.c.l.b16 %v133
    %v366 = vunpack.c.h.b16 %v133
    %v367 = vunpack.c.l.b16 %v134
    %v368 = vunpack.c.h.b16 %v134
    %v369 = vunpack.c.l.b16 %v135
    %v370 = vunpack.c.h.b16 %v135
    %v371 = vunpack.c.l.b16 %v136
    %v372 = vunpack.c.h.b16 %v136
    %v373 = vunpack.c.l.b16 %v137
    %v374 = vunpack.c.h.b16 %v137
    %v375 = vunpack.c.l.b16 %v138
    %v376 = vunpack.c.h.b16 %v138
    %v377 = vunpack.c.l.b16 %v139
    %v378 = vunpack.c.h.b16 %v139
    %v379 = vunpack.c.l.b16 %v140
    %v380 = vunpack.c.h.b16 %v140
    %v381 = vunpack.c.l.b16 %v141
    %v382 = vunpack.c.h.b16 %v141
    %v383 = vunpack.c.l.b16 %v142
    %v384 = vunpack.c.h.b16 %v142
    %v385 = vunpack.c.l.b16 %v143
    %v386 = vunpack.c.h.b16 %v143
    %v387 = vunpack.c.l.b16 %v144
    %v388 = vunpack.c.h.b16 %v144
    %v389 = vunpack.c.l.b16 %v145
    %v390 = vunpack.c.h.b16 %v145
    %v391 = vunpack.c.l.b16 %v146
    %v392 = vunpack.c.h.b16 %v146
    %v393 = vunpack.c.l.b16 %v147
    %v394 = vunpack.c.h.b16 %v147
    %v395 = vunpack.c.l.b16 %v148
    %v396 = vunpack.c.h.b16 %v148
    %v397 = vunpack.c.l.b16 %v149
    %v398 = vunpack.c.h.b16 %v149
    %v399 = vunpack.c.l.b16 %v150
    %v400 = vunpack.c.h.b16 %v150
    %v401 = vunpack.c.l.b16 %v151
    %v402 = vunpack.c.h.b16 %v151
    %v403 = vunpack.c.l.b16 %v152
    %v404 = vunpack.c.h.b16 %v152
    %v405 = vunpack.c.l.b16 %v153
    %v406 = vunpack.c.h.b16 %v153
    %v407 = vunpack.c.l.b16 %v154
    %v408 = vunpack.c.h.b16 %v154
    %v409 = vunpack.c.l.b16 %v155
    %v410 = vunpack.c.h.b16 %v155
    %v411 = vunpack.c.l.b16 %v156
    %v412 = vunpack.c.h.b16 %v156
    %v413 = vunpack.c.l.b16 %v157
    %v414 = vunpack.c.h.b16 %v157
    %v415 = vunpack.c.l.b16 %v158
    %v416 = vunpack.c.h.b16 %v158
    %v417 = vunpack.c.l.b16 %v159
    %v418 = vunpack.c.h.b16 %v159
    %v419 = vunpack.c.l.b16 %v160
    %v420 = vunpack.c.h.b16 %v160
    %v421 = vunpack.c.l.b16 %v161
    %v422 = vunpack.c.h.b16 %v161
    %v423 = vunpack.c.l.b16 %v162
    %v424 = vunpack.c.h.b16 %v162
    %v425 = vunpack.c.l.b16 %v163
    %v426 = vunpack.c.h.b16 %v163
    %v427 = vunpack.c.l.b16 %v164
    %v428 = vunpack.c.h.b16 %v164
    %v429 = vunpack.c.l.b16 %v165
    %v430 = vunpack.c.h.b16 %v165
    %v431 = vunpack.c.l.b16 %v166
    %v432 = vunpack.c.h.b16 %v166
    %v433 = vunpack.c.l.b16 %v167
    %v434 = vunpack.c.h.b16 %v167
    %v435 = vunpack.c.l.b16 %v168
    %v436 = vunpack.c.h.b16 %v168
    %v437 = vunpack.c.l.b16 %v169
    %v438 = vunpack.c.h.b16 %v169
    %v439 = vunpack.c.l.b16 %v170
    %v440 = vunpack.c.h.b16 %v170
    %v441 = vunpack.c.l.b16 %v171
    %v442 = vunpack.c.h.b16 %v171
    %v443 = vunpack.c.l.b16 %v172
    %v444 = vunpack.c.h.b16 %v172
    %v445 = vunpack.c.l.b16 %v173
    %v446 = vunpack.c.h.b16 %v173
    %v447 = vunpack.c.l.b16 %v174
    %v448 = vunpack.c.h.b16 %v174
    %v449 = vunpack.c.l.b16 %v175
    %v450 = vunpack.c.h.b16 %v175
    %v451 = vunpack.c.l.b16 %v176
    %v452 = vunpack.c.h.b16 %v176
    %v453 = vunpack.c.l.b16 %v177
    %v454 = vunpack.c.h.b16 %v177
    %v455 = vunpack.c.l.b16 %v178
    %v456 = vunpack.c.h.b16 %v178
    %v457 = vunpack.c.l.b16 %v179
    %v458 = vunpack.c.h.b16 %v179
    %v459 = vunpack.c.l.b16 %v180
    %v460 = vunpack.c.h.b16 %v180
    %v461 = vunpack.c.l.b16 %v181
    %v462 = vunpack.c.h.b16 %v181
    %v463 = vunpack.c.l.b16 %v182
    %v464 = vunpack.c.h.b16 %v182
    %v465 = vunpack.c.l.b16 %v183
    %v466 = vunpack.c.h.b16 %v183
    %v467 = vunpack.c.l.b16 %v184
    %v468 = vunpack.c.h.b16 %v184
    %v469 = vunpack.c.l.b16 %v185
    %v470 = vunpack.c.h.b16 %v185
    %v471 = vunpack.c.l.b16 %v186
    %v472 = vunpack.c.h.b16 %v186
    %v473 = vunpack.c.l.b16 %v187
    %v474 = vunpack.c.h.b16 %v187
    %v475 = vunpack.c.l.b16 %v188
    %v476 = vunpack.c.h.b16 %v188
    %v477 = vunpack.c.l.b16 %v189
    %v478 = vunpack.c.h.b16 %v189
    %v479 = vunpack.c.l.b16 %v190
    %v480 = vunpack.c.h.b16 %v190
    %v481 = vunpack.c.l.b16 %v191
    %v482 = vunpack.c.h.b16 %v191
    %v483 = vunpack.c.l.b16 %v192
    %v484 = vunpack.c.h.b16 %v192
    %v485 = vunpack.c.l.b16 %v193
    %v486 = vunpack.c.h.b16 %v193
    %v487 = vunpack.c.l.b16 %v194
    %v488 = vunpack.c.h.b16 %v194
    %v489 = vpack.c.b16 %v299, %v297
    %v490 = vpack.c.b16 %v300, %v298
    %v491 = vpack.c.b16 %v303, %v301
    %v492 = vpack.c.b16 %v304, %v302
    %v493 = vpack.c.b16 %v307, %v305
    %v494 = vpack.c.b16 %v308, %v306
    %v495 = vpack.c.b16 %v311, %v309
    %v496 = vpack.c.b16 %v312, %v310
    %v497 = vpack.c.b16 %v315, %v313
    %v498 = vpack.c.b16 %v316, %v314
    %v499 = vpack.c.b16 %v319, %v317
    %v500 = vpack.c.b16 %v320, %v318
    %v501 = vpack.c.b16 %v323, %v321
    %v502 = vpack.c.b16 %v324, %v322
    %v503 = vpack.c.b16 %v327, %v325
    %v504 = vpack.c.b16 %v328, %v326
    %v505 = vpack.c.b16 %v331, %v329
    %v506 = vpack.c.b16 %v332, %v330
    %v507 = vpack.c.b16 %v335, %v333
    %v508 = vpack.c.b16 %v336, %v334
    %v509 = vpack.c.b16 %v339, %v337
    %v510 = vpack.c.b16 %v340, %v338
    %v511 = vpack.c.b16 %v343, %v341
    %v512 = vpack.c.b16 %v344, %v342
    %v513 = vpack.c.b16 %v347, %v345
    %v514 = vpack.c.b16 %v348, %v346
    %v515 = vpack.c.b16 %v351, %v349
    %v516 = vpack.c.b16 %v352, %v350
    %v517 = vpack.c.b16 %v355, %v353
    %v518 = vpack.c.b16 %v356, %v354
    %v519 = vpack.c.b16 %v359, %v357
    %v520 = vpack.c.b16 %v360, %v358
    %v521 = vpack.c.b16 %v363, %v361
    %v522 = vpack.c.b16 %v364, %v362
    %v523 = vpack.c.b16 %v367, %v365
    %v524 = vpack.c.b16 %v368, %v366
    %v525 = vpack.c.b16 %v371, %v369
    %v526 = vpack.c.b16 %v372, %v370
    %v527 = vpack.c.b16 %v375, %v373
    %v528 = vpack.c.b16 %v376, %v374
    %v529 = vpack.c.b16 %v379, %v377
    %v530 = vpack.c.b16 %v380, %v378
    %v531 = vpack.c.b16 %v383, %v381
    %v532 = vpack.c.b16 %v384, %v382
    %v533 = vpack.c.b16 %v387, %v385
    %v534 = vpack.c.b16 %v388, %v386
    %v535 = vpack.c.b16 %v391, %v389
    %v536 = vpack.c.b16 %v392, %v390
    %v537 = vpack.c.b16 %v395, %v393
    %v538 = vpack.c.b16 %v396, %v394
    %v539 = vpack.c.b16 %v399, %v397
    %v540 = vpack.c.b16 %v400, %v398
    %v541 = vpack.c.b16 %v403, %v401
    %v542 = vpack.c.b16 %v404, %v402
    %v543 = vpack.c.b16 %v407, %v405
    %v544 = vpack.c.b16 %v408, %v406
    %v545 = vpack.c.b16 %v411, %v409
    %v546 = vpack.c.b16 %v412, %v410
    %v547 = vpack.c.b16 %v415, %v413
    %v548 = vpack.c.b16 %v416, %v414
    %v549 = vpack.c.b16 %v419, %v417
    %v550 = vpack.c.b16 %v420, %v418
    %v551 = vpack.c.b16 %v423, %v421
    %v552 = vpack.c.b16 %v424, %v422
    %v553 = vpack.c.b16 %v427, %v425
    %v554 = vpack.c.b16 %v428, %v426
    %v555 = vpack.c.b16 %v431, %v429
    %v556 = vpack.c.b16 %v432, %v430
    %v557 = vpack.c.b16 %v435, %v433
    %v558 = vpack.c.b16 %v436, %v434
    %v559 = vpack.c.b16 %v439, %v437
    %v560 = vpack.c.b16 %v440, %v438
    %v561 = vpack.c.b16 %v443, %v441
    %v562 = vpack.c.b16 %v444, %v442
    %v563 = vpack.c.b16 %v447, %v445
    %v564 = vpack.c.b16 %v448, %v446
    %v565 = vpack.c.b16 %v451, %v449
    %v566 = vpack.c.b16 %v452, %v450
    %v567 = vpack.c.b16 %v455, %v453
    %v568 = vpack.c.b16 %v456, %v454
    %v569 = vpack.c.b16 %v459, %v457
    %v570 = vpack.c.b16 %v460, %v458
    %v571 = vpack.c.b16 %v463, %v461
    %v572 = vpack.c.b16 %v464, %v462
    %v573 = vpack.c.b16 %v467, %v465
    %v574 = vpack.c.b16 %v468, %v466
    %v575 = vpack.c.b16 %v471, %v469
    %v576 = vpack.c.b16 %v472, %v470
    %v577 = vpack.c.b16 %v475, %v473
    %v578 = vpack.c.b16 %v476, %v474
    %v579 = vpack.c.b16 %v479, %v477
    %v580 = vpack.c.b16 %v480, %v478
    %v581 = vpack.c.b16 %v483, %v481
    %v582 = vpack.c.b16 %v484, %v482
    %v583 = vpack.c.b16 %v487, %v485
    %v584 = vpack.c.b16 %v488, %v486
    %681 = vmatpush.bf16.msra.mxu0 %v503
    %682 = vmatpush.bf16.msra.mxu0 %v501
    %683 = vmatpush.bf16.msra.mxu0 %v499
    %684 = vmatpush.bf16.msra.mxu0 %v497
    %685 = vmatpush.bf16.msra.mxu0 %v495
    %686 = vmatpush.bf16.msra.mxu0 %v493
    %687 = vmatpush.bf16.msra.mxu0 %v491
    %688 = vmatpush.bf16.msra.mxu0 %v489
    %689 = vmatmul.bf16.gmra.mxu0 %v87
    %v690 = vpop.f32.mrf.mxu0
    %v691 = vadd.f32 %v197, %v690
    %v692 = vpop.f32.mrf.mxu0
    %693 = vdwg.mxu0
    %694 = vmatpush.bf16.msra.mxu0 %v519
    %695 = vmatpush.bf16.msra.mxu0 %v517
    %696 = vmatpush.bf16.msra.mxu0 %v515
    %697 = vmatpush.bf16.msra.mxu0 %v513
    %698 = vmatpush.bf16.msra.mxu0 %v511
    %699 = vmatpush.bf16.msra.mxu0 %v509
    %700 = vmatpush.bf16.msra.mxu0 %v507
    %701 = vmatpush.bf16.msra.mxu0 %v505
    %702 = vmatmul.bf16.gmra.mxu0 %v89
    %v703 = vpop.f32.mrf.mxu0
    %v704 = vadd.f32 %v691, %v703
    %v705 = vpop.f32.mrf.mxu0
    %706 = vdwg.mxu0
    %707 = vmatpush.bf16.msra.mxu0 %v535
    %708 = vmatpush.bf16.msra.mxu0 %v533
    %709 = vmatpush.bf16.msra.mxu0 %v531
    %710 = vmatpush.bf16.msra.mxu0 %v529
    %711 = vmatpush.bf16.msra.mxu0 %v527
    %712 = vmatpush.bf16.msra.mxu0 %v525
    %713 = vmatpush.bf16.msra.mxu0 %v523
    %714 = vmatpush.bf16.msra.mxu0 %v521
    %715 = vmatmul.bf16.gmra.mxu0 %v91
    %v716 = vpop.f32.mrf.mxu0
    %v717 = vadd.f32 %v704, %v716
    %v718 = vpop.f32.mrf.mxu0
    %719 = vdwg.mxu0
    %720 = vmatpush.bf16.msra.mxu0 %v551
    %721 = vmatpush.bf16.msra.mxu0 %v549
    %722 = vmatpush.bf16.msra.mxu0 %v547
    %723 = vmatpush.bf16.msra.mxu0 %v545
    %724 = vmatpush.bf16.msra.mxu0 %v543
    %725 = vmatpush.bf16.msra.mxu0 %v541
    %726 = vmatpush.bf16.msra.mxu0 %v539
    %727 = vmatpush.bf16.msra.mxu0 %v537
    %728 = vmatmul.bf16.gmra.mxu0 %v93
    %v729 = vpop.f32.mrf.mxu0
    %v730 = vadd.f32 %v717, %v729
    %v731 = vpop.f32.mrf.mxu0
    %732 = vdwg.mxu0
    %733 = vmatpush.bf16.msra.mxu0 %v567
    %734 = vmatpush.bf16.msra.mxu0 %v565
    %735 = vmatpush.bf16.msra.mxu0 %v563
    %736 = vmatpush.bf16.msra.mxu0 %v561
    %737 = vmatpush.bf16.msra.mxu0 %v559
    %738 = vmatpush.bf16.msra.mxu0 %v557
    %739 = vmatpush.bf16.msra.mxu0 %v555
    %740 = vmatpush.bf16.msra.mxu0 %v553
    %741 = vmatmul.bf16.gmra.mxu0 %v95
    %v742 = vpop.f32.mrf.mxu0
    %v743 = vadd.f32 %v730, %v742
    %v744 = vpop.f32.mrf.mxu0
    %745 = vdwg.mxu0
    %746 = vmatpush.bf16.msra.mxu0 %v583
    %747 = vmatpush.bf16.msra.mxu0 %v581
    %748 = vmatpush.bf16.msra.mxu0 %v579
    %749 = vmatpush.bf16.msra.mxu0 %v577
    %750 = vmatpush.bf16.msra.mxu0 %v575
    %751 = vmatpush.bf16.msra.mxu0 %v573
    %752 = vmatpush.bf16.msra.mxu0 %v571
    %753 = vmatpush.bf16.msra.mxu0 %v569
    %754 = vmatmul.bf16.gmra.mxu0 %v97
    %v755 = vpop.f32.mrf.mxu0
    %v756 = vadd.f32 %v743, %v755
    %v757 = vpop.f32.mrf.mxu0
    %758 = vdwg.mxu0
    %759 = vmatpush.bf16.msra.mxu0 %v504
    %760 = vmatpush.bf16.msra.mxu0 %v502
    %761 = vmatpush.bf16.msra.mxu0 %v500
    %762 = vmatpush.bf16.msra.mxu0 %v498
    %763 = vmatpush.bf16.msra.mxu0 %v496
    %764 = vmatpush.bf16.msra.mxu0 %v494
    %765 = vmatpush.bf16.msra.mxu0 %v492
    %766 = vmatpush.bf16.msra.mxu0 %v490
    %767 = vmatmul.bf16.gmra.mxu0 %v87
    %v768 = vpop.f32.mrf.mxu0
    %v769 = vadd.f32 %v198, %v768
    %v770 = vpop.f32.mrf.mxu0
    %771 = vdwg.mxu0
    %772 = vmatpush.bf16.msra.mxu0 %v520
    %773 = vmatpush.bf16.msra.mxu0 %v518
    %774 = vmatpush.bf16.msra.mxu0 %v516
    %775 = vmatpush.bf16.msra.mxu0 %v514
    %776 = vmatpush.bf16.msra.mxu0 %v512
    %777 = vmatpush.bf16.msra.mxu0 %v510
    %778 = vmatpush.bf16.msra.mxu0 %v508
    %779 = vmatpush.bf16.msra.mxu0 %v506
    %780 = vmatmul.bf16.gmra.mxu0 %v89
    %v781 = vpop.f32.mrf.mxu0
    %v782 = vadd.f32 %v769, %v781
    %v783 = vpop.f32.mrf.mxu0
    %784 = vdwg.mxu0
    %785 = vmatpush.bf16.msra.mxu0 %v536
    %786 = vmatpush.bf16.msra.mxu0 %v534
    %787 = vmatpush.bf16.msra.mxu0 %v532
    %788 = vmatpush.bf16.msra.mxu0 %v530
    %789 = vmatpush.bf16.msra.mxu0 %v528
    %790 = vmatpush.bf16.msra.mxu0 %v526
    %791 = vmatpush.bf16.msra.mxu0 %v524
    %792 = vmatpush.bf16.msra.mxu0 %v522
    %793 = vmatmul.bf16.gmra.mxu0 %v91
    %v794 = vpop.f32.mrf.mxu0
    %v795 = vadd.f32 %v782, %v794
    %v796 = vpop.f32.mrf.mxu0
    %797 = vdwg.mxu0
    %798 = vmatpush.bf16.msra.mxu0 %v552
    %799 = vmatpush.bf16.msra.mxu0 %v550
    %800 = vmatpush.bf16.msra.mxu0 %v548
    %801 = vmatpush.bf16.msra.mxu0 %v546
    %802 = vmatpush.bf16.msra.mxu0 %v544
    %803 = vmatpush.bf16.msra.mxu0 %v542
    %804 = vmatpush.bf16.msra.mxu0 %v540
    %805 = vmatpush.bf16.msra.mxu0 %v538
    %806 = vmatmul.bf16.gmra.mxu0 %v93
    %v807 = vpop.f32.mrf.mxu0
    %v808 = vadd.f32 %v795, %v807
    %v809 = vpop.f32.mrf.mxu0
    %810 = vdwg.mxu0
    %811 = vmatpush.bf16.msra.mxu0 %v568
    %812 = vmatpush.bf16.msra.mxu0 %v566
    %813 = vmatpush.bf16.msra.mxu0 %v564
    %814 = vmatpush.bf16.msra.mxu0 %v562
    %815 = vmatpush.bf16.msra.mxu0 %v560
    %816 = vmatpush.bf16.msra.mxu0 %v558
    %817 = vmatpush.bf16.msra.mxu0 %v556
    %818 = vmatpush.bf16.msra.mxu0 %v554
    %819 = vmatmul.bf16.gmra.mxu0 %v95
    %v820 = vpop.f32.mrf.mxu0
    %v821 = vadd.f32 %v808, %v820
    %v822 = vpop.f32.mrf.mxu0
    %823 = vdwg.mxu0
    %824 = vmatpush.bf16.msra.mxu0 %v584
    %825 = vmatpush.bf16.msra.mxu0 %v582
    %826 = vmatpush.bf16.msra.mxu0 %v580
    %827 = vmatpush.bf16.msra.mxu0 %v578
    %828 = vmatpush.bf16.msra.mxu0 %v576
    %829 = vmatpush.bf16.msra.mxu0 %v574
    %830 = vmatpush.bf16.msra.mxu0 %v572
    %831 = vmatpush.bf16.msra.mxu0 %v570
    %832 = vmatmul.bf16.gmra.mxu0 %v97
    %v833 = vpop.f32.mrf.mxu0
    %v834 = vadd.f32 %v821, %v833
    %v835 = vpop.f32.mrf.mxu0
    %836 = vdwg.mxu0
    %v837 = vmax.f32 %v756, 0.0
    %v838 = vmax.f32 %v834, 0.0
    %v841 = vrot.slane %v837, 2
    %v842 = vrot.slane %v838, 2
    %v845 = vsub.f32 %v837, %v841
    %v846 = vsub.f32 %v838, %v842
    %v847 = vand.u32 2147483647, %v845
    %v848 = vand.u32 2147483647, %v846
    %v849 = vld [vmem:[%s4] sm:$0x3]
    %v851 = vperm.slane %v849, 0
    %v852 = vperm.slane %v849, 1
    %v855 = vmul.f32 %v847, %v851
    %v856 = vmul.f32 %v848, %v852
    %vm857 = vcmask 1041408
    %v858 = vsel %vm857, %v855, 0.0
    %v859 = vsel %vm857, %v856, 0.0
    %v860 = vadd.f32 %v858, %v859
    %861 = vadd.xlane.f32.xlu0 %v860
    %v862 = vpop.xlane.xlu0 %861
    %s863 = sld [smem:[#allocation2]]
    %v864 = vstv %s863
    %v865 = vadd.f32 %v862, %v864
    %v866 = vxor.u32 %v865, 2147483648
    %v867 = vmul.f32 %v866, 1.442695
    %v868 = vpow.pop %v867
    %v869 = vadd.f32 %v868, 1.0
    %v870 = vrcp.pop %v869
    %v871 = vmul.f32 %v869, %v870
    %v872 = vsub.f32 1.0, %v871
    %v873 = vmul.f32 %v870, %v872
    %v874 = vadd.f32 %v870, %v873
    %vm875 = vweird.f32 %v869
    %vm876 = vweird.f32 %v870
    %vm877 = vmor %vm875, %vm876
    %v878 = vsel %vm877, %v870, %v874
    %v879 = vand.u32 2147483647, %v869
    %vm880 = vcmp.eq.f32.partialorder %v879, 8.507059e+37
    %v881 = vand.u32 %v869, 2147483648
    %v882 = vor.u32 1.1754944e-38, %v881
    %v883 = vsel %vm880, %v882, %v878
    %v884 = vmul.f32 1.0, %v883
    %vm885 = vcmask 1024
    %886 = vst.msk [vmem:[%s6] sm:$0x3] %vm885, %v884
    // Predicated region
    $region38: #{tpu_custom_call.1} parent=1 // pred_check
      _
    $region39: #{tpu_custom_call.1} parent=1 // pred_check_branch
      %888 = sbr.rel (0) target = $region41
    $region40: #{tpu_custom_call.1} parent=1 // pred_region
      _
    $region41: #{tpu_custom_call.1} parent=1 // pred_fallthru
      _
    // Predicated region
    $region42: #{tpu_custom_call.1} parent=1 // pred_check
      _
    $region43: #{tpu_custom_call.1} parent=1 // pred_check_branch
      %890 = sbr.rel (0) target = $region45
    $region44: #{tpu_custom_call.1} parent=1 // pred_region
      _
    $region45: #{tpu_custom_call.1} parent=1 // pred_fallthru
      _
    %891 = vsyncpa [#allocation4], 1
    %892 = vsyncpa [#allocation6], 1

</llo_original>
